<compile_context>
chip_gen: v5e
topology: v5e:2x2
jax: 0.10.0
libtpu: 0.0.40
codegen_flags: <defaults>
</compile_context>

<pallas_src>
import math

import jax
import jax.numpy as jnp
from jax.experimental import pallas as pl
from jax.experimental.pallas import tpu as pltpu


# ---------------------------------------------------------------------------
# Kernels
# ---------------------------------------------------------------------------
def _emb_kernel_plain(x_ref, tab_ref, out_ref):
    """dim >= 128 path.  x: (tb, 1) f32; tab: (2, dim) [freq; phase]; out: (tb, dim)."""
    tab = tab_ref[...]
    emb = x_ref[...] * tab[0:1, :] + tab[1:2, :]
    out_ref[...] = jnp.sin(emb).astype(out_ref.dtype)


def _emb_kernel_folded(x_ref, selfreq_ref, phase_ref, out_ref):
    """dim < 128 lane-folded path.

    x: (tb, kpad) f32 (k timesteps per folded row, zero-padded to kpad>=8);
    selfreq: (kpad, W) selection*freq matrix; phase: (1, W); out: (tb, W), W = k*dim.
    The matmul performs both the lane expansion x[b] -> 128 lanes and the
    x*freq multiply on the (otherwise idle) MXU; sin is one EUP pass over a
    fully lane-dense tile, followed by one unmasked full-width store.
    """
    ang = jnp.dot(x_ref[...], selfreq_ref[...], preferred_element_type=jnp.float32)
    out_ref[...] = jnp.sin(ang + phase_ref[...]).astype(out_ref.dtype)


# ---------------------------------------------------------------------------
# Host-side planning helpers
# ---------------------------------------------------------------------------
def _round_up(n, m):
    return ((n + m - 1) // m) * m


def _vmem_plan():
    """Return (per-output-tile byte budget, vmem_limit_bytes), generation-aware."""
    try:
        cap = pltpu.get_tpu_info().vmem_capacity_bytes  # 128 MiB v5e/v6e, 64 MiB v7x
    except Exception:  # conservative fallback (v7x per-core size)
        cap = 64 << 20
    # Raise v5e's 16 MiB scoped default, stay well under v7x's 64 MiB physical.
    limit = int(min(cap // 2, 48 << 20))
    tile_budget = limit // 3  # double-buffered output tiles + inputs + slack fit limit
    return tile_budget, limit


def _plan_tiles(rows, row_bytes, tile_budget_bytes):
    """Pick (tile_rows, rows_pad, grid_steps) for the 1-D row grid.

    Goals: tile fits the VMEM budget; >= 2 grid steps whenever possible (so
    v7x's second TensorCore gets work); tile divides rows_pad exactly and
    rows_pad == rows whenever rows is already sublane-aligned (avoids the
    post-kernel slice, which is an extra HBM read+write of the whole output).
    """
    cap = max(8, (tile_budget_bytes // row_bytes) // 8 * 8)
    if rows <= 8 or (rows % 8 != 0 and rows * row_bytes <= tile_budget_bytes):
        # One full-array block: no sublane-alignment padding, no post-slice.
        return rows, rows, 1
    rows_pad = _round_up(rows, 8)
    if rows_pad >= 16:
        # Guarantee at least two grid steps for the megacore "parallel" axis.
        cap = min(cap, max(8, (rows_pad // 2) // 8 * 8))
    tile = 8
    for cand in range(min(cap, rows_pad), 7, -8):
        if rows_pad % cand == 0:
            tile = cand
            break
    return tile, rows_pad, rows_pad // tile


# ---------------------------------------------------------------------------
# Public wrapper
# ---------------------------------------------------------------------------
def sinusoidal_pos_emb(x, dim, out_dtype=jnp.float32):
    """Pallas TPU implementation of SinusoidalPosEmb(dim)(x) for x of shape (B,)."""
    assert dim % 2 == 0, "dim must be even"
    assert dim >= 4, "dim must be >= 4 (half_dim - 1 == 0 at dim == 2, as in torch)"

    half_dim = dim // 2
    scale = math.log(10000.0) / (half_dim - 1)
    b = x.shape[0]
    x = x.astype(jnp.float32)

    # Constant tables computed once on the host (never re-issued per grid step).
    j = jnp.arange(dim, dtype=jnp.float32)
    freq = jnp.exp(-scale * jnp.where(j < half_dim, j, j - half_dim))          # (dim,)
    phase = jnp.where(j < half_dim, 0.0, math.pi / 2.0).astype(jnp.float32)    # (dim,)

    # Lane-folding factor: pack k = 128/dim batch rows into the lane axis when
    # dim < 128 so every output block is 128-lane dense.  The row-major (B, dim)
    # output is the same memory as the folded (B/k, k*dim) view.
    k = 1
    if dim < 128 and 128 % dim == 0 and b % (128 // dim) == 0:
        k = 128 // dim
    w = k * dim
    rows = b // k

    out_itemsize = jnp.dtype(out_dtype).itemsize
    tile_budget, vmem_limit = _vmem_plan()
    # Budget per folded row: output row + the (lane-padded to 128) x row.
    plan_row_bytes = w * out_itemsize + 128 * 4
    tile, rows_pad, steps = _plan_tiles(rows, plan_row_bytes, tile_budget)

    cost = pl.CostEstimate(
        flops=2 * b * dim,
        transcendentals=b * dim,
        bytes_accessed=4 * b + rows_pad * w * out_itemsize + 10 * w * 4,
    )
    cparams = pltpu.CompilerParams(
        dimension_semantics=("parallel",),   # batch-tile axis: shard across TCs on v7x
        vmem_limit_bytes=vmem_limit,
    )

    if k == 1:
        # Plain path (dim >= 128, or batch not divisible by the fold factor).
        x2d = x.reshape(rows, 1)
        if rows_pad != rows:
            x2d = jnp.pad(x2d, ((0, rows_pad - rows), (0, 0)))
        tab = jnp.stack([freq, phase])                      # (2, dim): one input stream
        out = pl.pallas_call(
            _emb_kernel_plain,
            out_shape=jax.ShapeDtypeStruct((rows_pad, w), out_dtype),
            grid=(steps,),
            in_specs=[
                pl.BlockSpec((tile, 1), lambda i: (i, 0)),  # timesteps tile
                pl.BlockSpec((2, w), lambda i: (0, 0)),     # freq/phase table (pinned)
            ],
            out_specs=pl.BlockSpec((tile, w), lambda i: (i, 0)),
            compiler_params=cparams,
            cost_estimate=cost,
        )(x2d, tab)
        return out if rows_pad == rows else out[:b]

    # Lane-folded path (dim < 128).
    kpad = _round_up(k, 8)  # pad the tiny matmul contraction dim for clean lowering
    xf = x.reshape(rows, k)
    if kpad != k:
        xf = jnp.pad(xf, ((0, 0), (0, kpad - k)))
    if rows_pad != rows:
        xf = jnp.pad(xf, ((0, rows_pad - rows), (0, 0)))
    lane = jnp.arange(w)
    sel = (lane[None, :] // dim == jnp.arange(kpad)[:, None]).astype(jnp.float32)
    sel_freq = sel * jnp.tile(freq, k)[None, :]             # (kpad, w): selection * freq
    phase_row = jnp.tile(phase, k).reshape(1, w)            # (1, w)

    out = pl.pallas_call(
        _emb_kernel_folded,
        out_shape=jax.ShapeDtypeStruct((rows_pad, w), out_dtype),
        grid=(steps,),
        in_specs=[
            pl.BlockSpec((tile, kpad), lambda i: (i, 0)),   # k timesteps per folded row
            pl.BlockSpec((kpad, w), lambda i: (0, 0)),      # selection*freq (pinned)
            pl.BlockSpec((1, w), lambda i: (0, 0)),         # phase offsets (pinned)
        ],
        out_specs=pl.BlockSpec((tile, w), lambda i: (i, 0)),
        compiler_params=cparams,
        cost_estimate=cost,
    )(xf, sel_freq, phase_row)
    out = out.reshape(rows_pad * k, dim)                    # free: row-major contiguous
    return out if rows_pad == rows else out[:b]


# ---------------------------------------------------------------------------
# Reference + self-test
# ---------------------------------------------------------------------------
def _reference(x, dim):
    half_dim = dim // 2
    scale = math.log(10000.0) / (half_dim - 1)
    freqs = jnp.exp(jnp.arange(half_dim, dtype=jnp.float32) * -scale)
    emb = x.astype(jnp.float32)[:, None] * freqs[None, :]
    return jnp.concatenate([jnp.sin(emb), jnp.cos(emb)], axis=-1)


if __name__ == "__main__":
    key = jax.random.PRNGKey(0)
    # (B=8, dim=32) exercises the lane-folded dim<128 path; (B=16, dim=128)
    # exercises the plain path with a 2-step "parallel" grid.
    for b, dim in ((8, 32), (16, 128)):
        key, sub = jax.random.split(key)
        x = jax.random.uniform(sub, (b,), dtype=jnp.float32) * 100.0  # timesteps
        out = jax.block_until_ready(sinusoidal_pos_emb(x, dim))
        ref = _reference(x, dim)
        assert out.shape == (b, dim)
        assert out.dtype == jnp.float32
        assert jnp.allclose(out, ref, atol=1e-5, rtol=1e-5)
    print("KERNEL_OK")
</pallas_src>

<mosaic_0001>
module attributes {stable_mosaic.version = 11 : i64} {
  func.func @_emb_kernel_folded(%arg0: i32, %arg1: memref<2x8xf32, #tpu.memory_space<vmem>>, %arg2: memref<8x128xf32, #tpu.memory_space<vmem>>, %arg3: memref<1x128xf32, #tpu.memory_space<vmem>>, %arg4: memref<2x128xf32, #tpu.memory_space<vmem>>) attributes {dimension_semantics = [#tpu.dimension_semantics<parallel>], iteration_bounds = array<i64: 1>, scalar_prefetch = 0 : i64, scratch_operands = 0 : i64, tpu.core_type = #tpu.core_type<tc>, window_params = [{transform_indices = @transform_0, window_bounds = array<i64: 2, 8>}, {pipeline_mode = #tpu.pipeline_mode<synchronous>, transform_indices = @transform_1, window_bounds = array<i64: 8, 128>}, {pipeline_mode = #tpu.pipeline_mode<synchronous>, transform_indices = @transform_2, window_bounds = array<i64: 1, 128>}, {transform_indices = @transform_3, window_bounds = array<i64: 2, 128>}]} {
    %c0 = arith.constant 0 : index
    %c0_0 = arith.constant 0 : index
    %0 = vector.load %arg1[%c0, %c0_0] : memref<2x8xf32, #tpu.memory_space<vmem>>, vector<2x8xf32>
    %c0_1 = arith.constant 0 : index
    %c0_2 = arith.constant 0 : index
    %1 = vector.load %arg2[%c0_1, %c0_2] : memref<8x128xf32, #tpu.memory_space<vmem>>, vector<8x128xf32>
    %cst = arith.constant dense<0.000000e+00> : vector<2x128xf32>
    %2 = tpu.matmul %0, %1, %cst {dimension_numbers = #tpu.dot_dimension_numbers<[1], [0], [0], [1], [0, 0, 1, 1], [], []>} : vector<2x8xf32>, vector<8x128xf32>, vector<2x128xf32> -> vector<2x128xf32>
    %c0_3 = arith.constant 0 : index
    %c0_4 = arith.constant 0 : index
    %3 = vector.load %arg3[%c0_3, %c0_4] : memref<1x128xf32, #tpu.memory_space<vmem>>, vector<1x128xf32>
    %4 = vector.broadcast %3 : vector<1x128xf32> to vector<2x128xf32>
    %5 = arith.addf %2, %4 : vector<2x128xf32>
    %6 = math.sin %5 : vector<2x128xf32>
    %c0_5 = arith.constant 0 : index
    %c0_6 = arith.constant 0 : index
    %7 = vector.load %arg4[%c0_5, %c0_6] : memref<2x128xf32, #tpu.memory_space<vmem>>, vector<2x128xf32>
    tpu.vector_store %arg4[%c0_5, %c0_6], %6 {strides = array<i32>} : memref<2x128xf32, #tpu.memory_space<vmem>>, vector<2x128xf32>,
    return
  }
  func.func @transform_0(%arg0: i32) -> (i32, i32) {
    %c0_i32 = arith.constant 0 : i32
    %c0_i32_0 = arith.constant 0 : i32
    return %arg0, %c0_i32 : i32, i32
  }
  func.func @transform_1(%arg0: i32) -> (i32, i32) {
    %c0_i32 = arith.constant 0 : i32
    %c0_i32_0 = arith.constant 0 : i32
    %c0_i32_1 = arith.constant 0 : i32
    return %c0_i32, %c0_i32_0 : i32, i32
  }
  func.func @transform_2(%arg0: i32) -> (i32, i32) {
    %c0_i32 = arith.constant 0 : i32
    %c0_i32_0 = arith.constant 0 : i32
    %c0_i32_1 = arith.constant 0 : i32
    return %c0_i32, %c0_i32_0 : i32, i32
  }
  func.func @transform_3(%arg0: i32) -> (i32, i32) {
    %c0_i32 = arith.constant 0 : i32
    %c0_i32_0 = arith.constant 0 : i32
    return %arg0, %c0_i32 : i32, i32
  }
}

</mosaic_0001>

<llo_original>
// kernel: tpu_custom_call.1
$region0: #{tpu_custom_call.1}
  #allocation0 [shape = 'u32[]', space=smem, size = 0x4, offset = 0x4, fixed_abs, tag = 'smem constant byte address 0x4 - core index']
  #allocation1 [shape = 'u32[72,128]{1,0:T(1,128)}', space=vmem, size = 0x9000, scoped, tag = 'internal scratch']
  %s0 = inlined_call_operand.hbm [shape: f32[2,8], index: 0, kind: input, shape index: {}]
  %s1 = inlined_call_operand.hbm [shape: f32[8,128], index: 1, kind: input, shape index: {}]
  %s2 = inlined_call_operand.vmem [shape: f32[1,128], index: 2, kind: input, shape index: {}]
  %s3 = inlined_call_operand.hbm [shape: f32[2,128], index: 3, kind: output, shape index: {}]
  %s4 = sld [smem:[#allocation0]]
  $region30: #{tpu_custom_call.1} parent=0
    _
  %s6 = ssub.s32 1, %s4
  %s7 = scalar_select 0, %s6, %s4
  $region1: #{tpu_custom_call.1} parent=0
    #allocation2 [shape = 'u8[1024]{0}', space=vmem, size = 0x400, scoped, tag = 'input window, operand 0, single buffered']
    #allocation3 [shape = 's32[1]{0}', space=sflag, size = 0x4, scoped, tag = 'scoped memory for tpu_custom_call.1']
    #allocation4 [shape = 's32[1]{0}', space=sflag, size = 0x4, scoped, tag = 'scoped memory for tpu_custom_call.1']
    #allocation5 [shape = 'u8[4096]{0}', space=vmem, size = 0x1000, scoped, tag = 'input window, operand 1, single buffered']
    #allocation6 [shape = 's32[1]{0}', space=sflag, size = 0x4, scoped, tag = 'scoped memory for tpu_custom_call.1']
    #allocation7 [shape = 'u8[1024]{0}', space=vmem, size = 0x400, scoped, tag = 'output window, operand 0, single buffered']
    %8 = vsyncpa [#allocation3], 0
    %9 = vsyncpa [#allocation6], 0
    %10 = vsyncpa [#allocation4], 0
    // Predicated region
    $region2: #{tpu_custom_call.1} parent=1 // pred_check
      _
    $region3: #{tpu_custom_call.1} parent=1 // pred_check_branch
      %12 = sbr.rel (0) target = $region5
    $region4: #{tpu_custom_call.1} parent=1 // pred_region
      %14 = vsyncadd [#allocation3], 0
      %s16 = sshll.u32 %s0, 4
      %s17 = int_to_ptr.hbm [resolvable:$true] %s16
      %s18 = sshll.u32 [#allocation2], 4
      %s19 = int_to_ptr.vmem [resolvable:$true] %s18
      %21 = dma.hbm_to_vmem [thread:$0]  %s17, 32, %s19, [#allocation3]
    $region5: #{tpu_custom_call.1} parent=1 // pred_fallthru
      _
    // Predicated region
    $region6: #{tpu_custom_call.1} parent=1 // pred_check
      _
    $region7: #{tpu_custom_call.1} parent=1 // pred_check_branch
      %23 = sbr.rel (0) target = $region9
    $region8: #{tpu_custom_call.1} parent=1 // pred_region
      %25 = vsyncadd [#allocation6], 0
      %s27 = sshll.u32 %s1, 4
      %s28 = int_to_ptr.hbm [resolvable:$true] %s27
      %s29 = sshll.u32 [#allocation5], 4
      %s30 = int_to_ptr.vmem [resolvable:$true] %s29
      %32 = dma.hbm_to_vmem [thread:$0]  %s28, 128, %s30, [#allocation6]
    $region9: #{tpu_custom_call.1} parent=1 // pred_fallthru
      _
    // Predicated region
    $region10: #{tpu_custom_call.1} parent=1 // pred_check
      _
    $region11: #{tpu_custom_call.1} parent=1 // pred_check_branch
      %34 = sbr.rel (0) target = $region13
    $region12: #{tpu_custom_call.1} parent=1 // pred_region
      _
    $region13: #{tpu_custom_call.1} parent=1 // pred_fallthru
      _
    // Predicated region
    $region14: #{tpu_custom_call.1} parent=1 // pred_check
      _
    $region15: #{tpu_custom_call.1} parent=1 // pred_check_branch
      %36 = sbr.rel (0) target = $region17
    $region16: #{tpu_custom_call.1} parent=1 // pred_region
      %38 = dma.done [#allocation3], 32
    $region17: #{tpu_custom_call.1} parent=1 // pred_fallthru
      _
    // Predicated region
    $region18: #{tpu_custom_call.1} parent=1 // pred_check
      _
    $region19: #{tpu_custom_call.1} parent=1 // pred_check_branch
      %40 = sbr.rel (0) target = $region21
    $region20: #{tpu_custom_call.1} parent=1 // pred_region
      %42 = dma.done [#allocation6], 128
    $region21: #{tpu_custom_call.1} parent=1 // pred_fallthru
      _
    %v43 = vld [vmem:[#allocation2] sm:$0x3]
    %v44 = vld [vmem:[#allocation5] sm:$0xff]
    %v45 = vld [vmem:[%s2] sm:$0x1]
    %v47 = vperm.slane %v45, 0
    %vm49 = vcmask 64512
    %v51 = vsel %vm49, %v43, 0
    %53 = vmatpush.msra.mxu0 0.0
    %54 = vmatpush.msra.mxu0 0.0
    %55 = vmatpush.msra.mxu0 0.0
    %56 = vmatpush.msra.mxu0 0.0
    %57 = vmatpush.msra.mxu0 0.0
    %58 = vmatpush.msra.mxu0 0.0
    %59 = vmatpush.msra.mxu0 0.0
    %60 = vmatpush.msra.mxu0 0.0
    %61 = vmatpush.msra.mxu0 0.0
    %62 = vmatpush.msra.mxu0 0.0
    %63 = vmatpush.msra.mxu0 0.0
    %64 = vmatpush.msra.mxu0 0.0
    %65 = vmatpush.msra.mxu0 0.0
    %66 = vmatpush.msra.mxu0 0.0
    %67 = vmatpush.msra.mxu0 0.0
    %68 = vmatpush.msra.mxu0 %v44
    %69 = vmatmul.f32.gmra.mxu0 %v51
    %v70 = vpop.f32.mrf.mxu0
    %v71 = vadd.f32 %v47, %v70
    %72 = vdwg.mxu0
    %v73 = vand.u32 2147483647, %v71
    %vm74 = vcmp.le.f32.partialorder %v73, 0.7853982
    %vm75 = vcmp.lt.s32.totalorder %v71, 0
    %v76 = vand.u32 %v71, 2139095040
    %v77 = vshrl.u32 %v76, 23
    %v78 = vsub.s32 %v77, 127
    %v79 = vand.u32 2147483647, %v71
    %v80 = vand.u32 %v79, 8388607
    %v81 = vor.u32 %v80, 8388608
    %v82 = vsub.s32 0, %v81
    %v83 = vadd.s32 %v78, 1
    %vm84 = vcmp.gt.s32.totalorder %v83, 0
    %v85 = vsel %vm84, %v83, 0
    %v86 = vshrl.u32 %v85, 5
    %v87 = vand.u32 %v85, 31
    %v88 = vsub.s32 32, %v87
    %v89 = vshrl.u32 683565275, %v88
    %v90 = vshll.u32 683565275, %v87
    %v91 = vshrl.u32 2475754826, %v88
    %v92 = vor.u32 %v90, %v91
    %v93 = vshll.u32 2475754826, %v87
    %v94 = vshrl.u32 2131351028, %v88
    %v95 = vor.u32 %v93, %v94
    %v96 = vshll.u32 2131351028, %v87
    %v97 = vshrl.u32 2102212464, %v88
    %v98 = vor.u32 %v96, %v97
    %v99 = vshll.u32 2102212464, %v87
    %v100 = vshrl.u32 920167782, %v88
    %v101 = vor.u32 %v99, %v100
    %v102 = vshll.u32 920167782, %v87
    %v103 = vshrl.u32 1326507024, %v88
    %v104 = vor.u32 %v102, %v103
    %vm105 = vcmp.lt.s32.totalorder %v86, 1
    %vm106 = vcmp.lt.s32.totalorder %v86, 2
    %vm107 = vcmp.lt.s32.totalorder %v86, 3
    %vm108 = vcmp.lt.s32.totalorder %v86, 4
    %v109 = vsel %vm105, %v89, %v92
    %v110 = vsel %vm108, %v98, 2102212464
    %v111 = vsel %vm107, %v95, %v110
    %v112 = vsel %vm106, %v109, %v111
    %v113 = vsel %vm105, %v92, %v95
    %v114 = vsel %vm108, %v101, 920167782
    %v115 = vsel %vm107, %v98, %v114
    %v116 = vsel %vm106, %v113, %v115
    %v117 = vsel %vm105, %v95, %v98
    %v118 = vsel %vm108, %v104, 1326507024
    %v119 = vsel %vm107, %v101, %v118
    %v120 = vsel %vm106, %v117, %v119
    %v121 = vshll.u32 %v81, 8
    %v122 = vand.u32 %v121, 65535
    %v123 = vshrl.u32 %v121, 16
    %v124 = vand.u32 %v120, 65535
    %v125 = vshrl.u32 %v120, 16
    %v126 = vmul.u32 %v122, %v124
    %v127 = vmul.u32 %v122, %v125
    %v128 = vmul.u32 %v123, %v124
    %v129 = vmul.u32 %v123, %v125
    %v130 = vshll.u32 %v127, 16
    %v131 = vshrl.u32 %v127, 16
    %v132 = vshll.u32 %v128, 16
    %v133 = vshrl.u32 %v128, 16
    %vm134 = vc.u32 %v126, %v130
    %v135 = vsel %vm134, 1, 0
    %v136 = vadd.s32 %v126, %v130
    %v137 = vadd.s32 %v129, %v135
    %vm138 = vc.u32 %v136, %v132
    %v139 = vsel %vm138, 1, 0
    %v140 = vadd.s32 %v136, %v132
    %v141 = vadd.s32 %v137, %v139
    %v142 = vadd.s32 %v141, %v131
    %v143 = vadd.s32 %v142, %v133
    %v144 = vand.u32 %v121, 65535
    %v145 = vshrl.u32 %v121, 16
    %v146 = vand.u32 %v116, 65535
    %v147 = vshrl.u32 %v116, 16
    %v148 = vmul.u32 %v144, %v146
    %v149 = vmul.u32 %v144, %v147
    %v150 = vmul.u32 %v145, %v146
    %v151 = vmul.u32 %v145, %v147
    %v152 = vshll.u32 %v149, 16
    %v153 = vshrl.u32 %v149, 16
    %v154 = vshll.u32 %v150, 16
    %v155 = vshrl.u32 %v150, 16
    %vm156 = vc.u32 %v148, %v152
    %v157 = vsel %vm156, 1, 0
    %v158 = vadd.s32 %v148, %v152
    %v159 = vadd.s32 %v151, %v157
    %vm160 = vc.u32 %v158, %v154
    %v161 = vsel %vm160, 1, 0
    %v162 = vadd.s32 %v158, %v154
    %v163 = vadd.s32 %v159, %v161
    %v164 = vadd.s32 %v163, %v153
    %v165 = vadd.s32 %v164, %v155
    %v166 = vmul.u32 %v121, %v112
    %v167 = vadd.s32 %v143, %v162
    %vm168 = vc.u32 %v143, %v162
    %v169 = vadd.s32 %v165, 1
    %v170 = vsel %vm168, %v169, %v165
    %v171 = vadd.s32 %v166, %v170
    %v172 = vadd.s32 %v171, 536870912
    %v173 = vshrl.u32 %v172, 30
    %v174 = vshll.u32 %v173, 30
    %v175 = vsub.s32 %v171, %v174
    %vm176 = vcmp.lt.s32.totalorder %v175, 0
    %v177 = vsub.s32 0, %v175
    %v178 = vsel %vm176, %v177, %v175
    %v179 = vclz %v178
    %v180 = vsub.s32 %v179, 2
    %vm181 = vcmp.gt.s32.totalorder 0, %v180
    %v182 = vsel %vm181, 0, %v180
    %v183 = vsub.s32 32, %v182
    %v184 = vshll.u32 %v175, %v182
    %v185 = vshrl.u32 %v167, %v183
    %v186 = vor.u32 %v184, %v185
    %v187 = vsub.s32 4294967266, %v182
    %v188 = vadd.s32 %v187, 127
    %v189 = vshll.u32 %v188, 23
    %v190 = vor.u32 4788187, %v189
    %v191 = vand.u32 2147483647, %v190
    %v193 = vcvt.s32.f32 %v186
    %v194 = vmul.f32 %v193, %v191
    %v195 = vxor.u32 %v194, 2147483648
    %v196 = vsel %vm75, %v195, %v194
    %v197 = vsub.s32 4, %v173
    %v198 = vsel %vm75, %v197, %v173
    %v199 = vsel %vm74, %v71, %v196
    %v200 = vsel %vm74, 0, %v198
    %v201 = vmul.f32 %v199, %v199
    %v202 = vmul.f32 %v201, -0.001358992
    %v203 = vadd.f32 %v202, 0.041655596
    %v204 = vmul.f32 %v201, %v203
    %v205 = vadd.f32 %v204, -0.4999988
    %v206 = vmul.f32 %v201, %v205
    %v207 = vadd.f32 1.0, %v206
    %v208 = vmul.f32 %v199, %v199
    %v209 = vmul.f32 %v208, -0.00019511016
    %v210 = vadd.f32 %v209, 0.008332121
    %v211 = vmul.f32 %v208, %v210
    %v212 = vadd.f32 %v211, -0.16666654
    %v213 = vmul.f32 %v208, %v212
    %v214 = vadd.f32 %v213, 1.0
    %v215 = vmul.f32 %v214, %v199
    %vm216 = vweird.f32 %v71
    %v217 = vadd.s32 %v200, 3
    %v218 = vand.u32 %v217, 3
    %vm219 = vcmp.lt.s32.totalorder %v218, 2
    %vm220 = vcmp.eq.s32.totalorder %v218, 0
    %v221 = vxor.u32 %v215, 2147483648
    %v222 = vsel %vm220, %v207, %v221
    %vm223 = vcmp.eq.s32.totalorder %v218, 2
    %v224 = vxor.u32 %v207, 2147483648
    %v225 = vsel %vm223, %v224, %v215
    %v226 = vsel %vm219, %v222, %v225
    %v227 = vsel %vm216, nan, %v226
    %228 = vst [vmem:[#allocation7] sm:$0x3] %v227
    // Predicated region
    $region22: #{tpu_custom_call.1} parent=1 // pred_check
      _
    $region23: #{tpu_custom_call.1} parent=1 // pred_check_branch
      %230 = sbr.rel (0) target = $region25
    $region24: #{tpu_custom_call.1} parent=1 // pred_region
      %232 = vsyncadd [#allocation4], 0
      %s234 = sshll.u32 [#allocation7], 4
      %s235 = int_to_ptr.vmem [resolvable:$true] %s234
      %s236 = sshll.u32 %s3, 4
      %s237 = int_to_ptr.hbm [resolvable:$true] %s236
      %239 = dma.vmem_to_hbm [thread:$0]  %s235, 32, %s237, [#allocation4]
    $region25: #{tpu_custom_call.1} parent=1 // pred_fallthru
      _
    // Predicated region
    $region26: #{tpu_custom_call.1} parent=1 // pred_check
      _
    $region27: #{tpu_custom_call.1} parent=1 // pred_check_branch
      %241 = sbr.rel (0) target = $region29
    $region28: #{tpu_custom_call.1} parent=1 // pred_region
      %243 = dma.done [#allocation4], 32
    $region29: #{tpu_custom_call.1} parent=1 // pred_fallthru
      _
    %244 = vsyncpa [#allocation3], 1
    %245 = vsyncpa [#allocation6], 1
    %246 = vsyncpa [#allocation4], 1

</llo_original>
